<compile_context>
chip_gen: v6e
topology: v6e:2x2x1
jax: 0.10.0
libtpu: 0.0.40
codegen_flags: <defaults>
</compile_context>

<pallas_src>
import jax
import jax.numpy as jnp
from jax.experimental import pallas as pl
from jax.experimental.pallas import tpu as pltpu

LANES = 128
SUBLANES = 8
NUM_PARTIALS = 2  # leading "parallel" grid axis (uses both v7x TensorCores)


def _rmse_partial_kernel(a_ref, b_ref, out_ref):
    # out_ref is an (8, 128) f32 block, resident across the reduction axis
    # (its index_map only depends on the parallel axis) -> use it directly as
    # the per-core accumulator.
    @pl.when(pl.program_id(1) == 0)
    def _():
        out_ref[...] = jnp.zeros_like(out_ref)

    d = a_ref[...].astype(jnp.float32) - b_ref[...].astype(jnp.float32)
    sq = d * d
    br = sq.shape[0]
    # (br, 128) -> (br//8, 8, 128): groups of 8 rows align with (8,128) vreg
    # tiles, so the reshape is layout-preserving; the sum over the leading axis
    # is pure cross-vreg VPU adds (no cross-lane/XLU work in the hot loop).
    out_ref[...] += jnp.sum(sq.reshape(br // SUBLANES, SUBLANES, LANES), axis=0)


def rmse_pallas(neural: jax.Array, ideal: jax.Array, *, block_rows: int = 2048) -> jax.Array:
    assert neural.shape == ideal.shape, "inputs must have the same shape"
    n_true = int(neural.size)
    assert n_true > 0

    # Choose the row-tile size: multiple of 8 sublanes, no larger than needed,
    # capped so (2 inputs x 2 pipeline buffers) stay well inside VMEM everywhere.
    rows_needed = -(-n_true // LANES)
    max_block_rows = -(-rows_needed // SUBLANES) * SUBLANES
    br = max(SUBLANES, min(block_rows, max_block_rows, 8192))
    br = -(-br // SUBLANES) * SUBLANES

    steps_total = -(-rows_needed // br)
    steps_per_core = -(-steps_total // NUM_PARTIALS)
    total_rows = NUM_PARTIALS * steps_per_core * br
    padded_size = total_rows * LANES

    def _prep(x):
        flat = x.reshape(-1)  # layout-preserving, no copy
        if padded_size != n_true:
            # Single zero-pad; padded positions are zero in BOTH inputs, so the
            # difference there is exactly 0 and contributes nothing to the sum.
            flat = jnp.pad(flat, (0, padded_size - n_true))
        return flat.reshape(total_rows, LANES)

    a2d = _prep(neural)  # native dtype; cast to f32 happens inside the kernel
    b2d = _prep(ideal)

    # Raise the scoped-VMEM limit only if the pipeline buffers get large
    # (relevant when sweeping block_rows on v5e, whose default limit is 16 MiB).
    itemsize = max(jnp.dtype(neural.dtype).itemsize, jnp.dtype(ideal.dtype).itemsize)
    pipeline_bytes = 2 * 2 * br * LANES * itemsize
    cp_kwargs = {}
    if pipeline_bytes > 12 * (1 << 20):
        cp_kwargs["vmem_limit_bytes"] = 32 << 20  # safe on v5e/v6e/v7x

    partials = pl.pallas_call(
        _rmse_partial_kernel,
        out_shape=jax.ShapeDtypeStruct((NUM_PARTIALS * SUBLANES, LANES), jnp.float32),
        grid_spec=pltpu.PrefetchScalarGridSpec(
            num_scalar_prefetch=0,
            grid=(NUM_PARTIALS, steps_per_core),
            in_specs=[
                pl.BlockSpec((br, LANES), lambda c, i: (c * steps_per_core + i, 0)),
                pl.BlockSpec((br, LANES), lambda c, i: (c * steps_per_core + i, 0)),
            ],
            out_specs=pl.BlockSpec((SUBLANES, LANES), lambda c, i: (c, 0)),
        ),
        compiler_params=pltpu.CompilerParams(
            dimension_semantics=("parallel", "arbitrary"),
            **cp_kwargs,
        ),
    )(a2d, b2d)

    # Tiny epilogue on a (16, 128) array: combine per-core partial sums,
    # divide by the true element count and take the square root.
    return jnp.sqrt(jnp.sum(partials) / jnp.float32(n_true))


if __name__ == "__main__":
    key = jax.random.PRNGKey(0)
    k1, k2 = jax.random.split(key)

    # Small shapes consistent with a generic pair of tensors (NCHW-like).
    neural = jax.random.normal(k1, (2, 4, 16, 16), dtype=jnp.float32)
    ideal = jax.random.normal(k2, (2, 4, 16, 16), dtype=jnp.float32)

    result = jax.block_until_ready(rmse_pallas(neural, ideal))
    ref = jnp.sqrt(jnp.mean((neural - ideal) ** 2))
    assert jnp.allclose(result, ref, rtol=1e-5, atol=1e-6), (result, ref)

    # Extra check: odd, non-128-aligned size exercises the zero-pad tail path.
    k3, k4 = jax.random.split(k2)
    a_odd = jax.random.normal(k3, (3, 5, 7), dtype=jnp.float32)
    b_odd = jax.random.normal(k4, (3, 5, 7), dtype=jnp.float32)
    r_odd = jax.block_until_ready(rmse_pallas(a_odd, b_odd))
    ref_odd = jnp.sqrt(jnp.mean((a_odd - b_odd) ** 2))
    assert jnp.allclose(r_odd, ref_odd, rtol=1e-5, atol=1e-6), (r_odd, ref_odd)

    print("KERNEL_OK")
</pallas_src>

<mosaic_0001>
module attributes {stable_mosaic.version = 11 : i64} {
  func.func @_rmse_partial_kernel(%arg0: i32, %arg1: i32, %arg2: memref<16x128xf32, #tpu.memory_space<vmem>>, %arg3: memref<16x128xf32, #tpu.memory_space<vmem>>, %arg4: memref<8x128xf32, #tpu.memory_space<vmem>>) attributes {dimension_semantics = [#tpu.dimension_semantics<parallel>, #tpu.dimension_semantics<arbitrary>], iteration_bounds = array<i64: 2, 1>, scalar_prefetch = 0 : i64, scratch_operands = 0 : i64, tpu.core_type = #tpu.core_type<tc>, window_params = [{transform_indices = @transform_0, window_bounds = array<i64: 16, 128>}, {transform_indices = @transform_1, window_bounds = array<i64: 16, 128>}, {transform_indices = @transform_2, window_bounds = array<i64: 8, 128>}]} {
    %c0_i32 = arith.constant 0 : i32
    %0 = arith.cmpi eq, %arg1, %c0_i32 : i32
    %1 = arith.extui %0 : i1 to i32
    %c0_i32_0 = arith.constant 0 : i32
    %2 = arith.cmpi ne, %1, %c0_i32_0 : i32
    scf.if %2 {
      %cst_8 = arith.constant 0.000000e+00 : f32
      %12 = vector.broadcast %cst_8 : f32 to vector<8x128xf32>
      %c0_9 = arith.constant 0 : index
      %c0_10 = arith.constant 0 : index
      %13 = vector.load %arg4[%c0_9, %c0_10] : memref<8x128xf32, #tpu.memory_space<vmem>>, vector<8x128xf32>
      tpu.vector_store %arg4[%c0_9, %c0_10], %12 {strides = array<i32>} : memref<8x128xf32, #tpu.memory_space<vmem>>, vector<8x128xf32>,
    } else {
    }
    %c0 = arith.constant 0 : index
    %c0_1 = arith.constant 0 : index
    %3 = vector.load %arg2[%c0, %c0_1] : memref<16x128xf32, #tpu.memory_space<vmem>>, vector<16x128xf32>
    %c0_2 = arith.constant 0 : index
    %c0_3 = arith.constant 0 : index
    %4 = vector.load %arg3[%c0_2, %c0_3] : memref<16x128xf32, #tpu.memory_space<vmem>>, vector<16x128xf32>
    %5 = arith.subf %3, %4 : vector<16x128xf32>
    %6 = arith.mulf %5, %5 : vector<16x128xf32>
    %c0_4 = arith.constant 0 : index
    %c0_5 = arith.constant 0 : index
    %7 = vector.load %arg4[%c0_4, %c0_5] : memref<8x128xf32, #tpu.memory_space<vmem>>, vector<8x128xf32>
    %8 = vector.shape_cast %6 : vector<16x128xf32> to vector<2x8x128xf32>
    %cst = arith.constant dense<0.000000e+00> : vector<8x128xf32>
    %9 = vector.multi_reduction <add>, %8, %cst [0] : vector<2x8x128xf32> to vector<8x128xf32>
    %10 = arith.addf %7, %9 : vector<8x128xf32>
    %c0_6 = arith.constant 0 : index
    %c0_7 = arith.constant 0 : index
    %11 = vector.load %arg4[%c0_6, %c0_7] : memref<8x128xf32, #tpu.memory_space<vmem>>, vector<8x128xf32>
    tpu.vector_store %arg4[%c0_6, %c0_7], %10 {strides = array<i32>} : memref<8x128xf32, #tpu.memory_space<vmem>>, vector<8x128xf32>,
    return
  }
  func.func @transform_0(%arg0: i32, %arg1: i32) -> (i32, i32) {
    %c1_i32 = arith.constant 1 : i32
    %0 = arith.muli %arg0, %c1_i32 : i32
    %1 = arith.addi %0, %arg1 : i32
    %c0_i32 = arith.constant 0 : i32
    %c0_i32_0 = arith.constant 0 : i32
    return %1, %c0_i32 : i32, i32
  }
  func.func @transform_1(%arg0: i32, %arg1: i32) -> (i32, i32) {
    %c1_i32 = arith.constant 1 : i32
    %0 = arith.muli %arg0, %c1_i32 : i32
    %1 = arith.addi %0, %arg1 : i32
    %c0_i32 = arith.constant 0 : i32
    %c0_i32_0 = arith.constant 0 : i32
    return %1, %c0_i32 : i32, i32
  }
  func.func @transform_2(%arg0: i32, %arg1: i32) -> (i32, i32) {
    %c0_i32 = arith.constant 0 : i32
    %c0_i32_0 = arith.constant 0 : i32
    return %arg0, %c0_i32 : i32, i32
  }
}

</mosaic_0001>

<llo_original>
// kernel: tpu_custom_call.1
$region0: #{tpu_custom_call.1}
  #allocation0 [shape = 'u32[]', space=smem, size = 0x4, offset = 0x4, fixed_abs, tag = 'smem constant byte address 0x4 - core index']
  #allocation1 [shape = 'u32[144,128]{1,0:T(1,128)}', space=vmem, size = 0x12000, scoped, tag = 'internal scratch']
  %s0 = inlined_call_operand.hbm [shape: f32[32,128], index: 0, kind: input, shape index: {}]
  %s1 = inlined_call_operand.hbm [shape: f32[32,128], index: 1, kind: input, shape index: {}]
  %s2 = inlined_call_operand.hbm [shape: f32[16,128], index: 2, kind: output, shape index: {}]
  %s3 = sld [smem:[#allocation0]]
  $region53: #{tpu_custom_call.1} parent=0
    _
  %s5 = ssub.s32 1, %s3
  %s6 = scalar_select 0, %s5, %s3
  $region1: #{tpu_custom_call.1} parent=0
    #allocation2 [shape = 'u8[16384]{0}', space=vmem, size = 0x4000, scoped, tag = 'input window, operand 0']
    #allocation3 [shape = 's32[2]{0}', space=sflag, size = 0x8, scoped, tag = 'scoped memory for tpu_custom_call.1']
    #allocation4 [shape = 's32[2]{0}', space=sflag, size = 0x8, scoped, tag = 'scoped memory for tpu_custom_call.1']
    #allocation5 [shape = 'u8[16384]{0}', space=vmem, size = 0x4000, scoped, tag = 'input window, operand 1']
    #allocation6 [shape = 's32[2]{0}', space=sflag, size = 0x8, scoped, tag = 'scoped memory for tpu_custom_call.1']
    #allocation7 [shape = 'u8[8192]{0}', space=vmem, size = 0x2000, scoped, tag = 'output window, operand 0']
    %7 = vsyncpa [#allocation3], 0
    %s8 = scalar_lea.sflag [#allocation3], 1
    %9 = vsyncpa %s8, 0
    %10 = vsyncpa [#allocation6], 0
    %s11 = scalar_lea.sflag [#allocation6], 1
    %12 = vsyncpa %s11, 0
    %13 = vsyncpa [#allocation4], 0
    %s14 = scalar_lea.sflag [#allocation4], 1
    %15 = vsyncpa %s14, 0
    loop: start=0, step=1, limit=4
    $region2: #{tpu_custom_call.1} parent=1 // loop_pre_header
      _
    $region3: #{tpu_custom_call.1} parent=1 // loop_header
      %s17 = sphi 0, %s21
      %p18 = scmp.ge.s32.totalorder %s17, 4
      %s24 = sphi 0, %s36
      %s25 = sphi 0, %s32
      %s26 = sphi 0, %s24
      %s27 = sphi 0, %s25
      %s28 = sphi 0, %s26
      %s29 = sphi 0, %s27
      %s41 = sphi 0, %s43
      %s44 = sphi 0, %s41
      %s45 = sphi 0, %s44
      %s61 = sphi 0, %s45
      %s69 = sphi 0, %s71
      %s72 = sphi 0, %s69
      %s73 = sphi 0, %s72
      %s89 = sphi 0, %s73
      %s95 = sphi 0, %s97
      %s98 = sphi 0, %s95
      %s99 = sphi 0, %s98
      %s115 = sphi 0, %s99
    $region4: #{tpu_custom_call.1} parent=1 // loop_header_branch
      %20 = sbr.rel (%p18) target = $region8
    $region5: #{tpu_custom_call.1} parent=1 // loop_body
      %s22 = ssub.s32 %s17, 1
      %s23 = ssub.s32 %s17, 2
      %s30 = sadd.s32 1, %s25
      %p31 = scmp.ge.s32.totalorder %s30, 1
      %s32 = scalar_select %p31, 0, %s30
      %s33 = sadd.s32 1, %s24
      %s34 = scalar_select %p31, %s33, %s24
      %p35 = scmp.ge.s32.totalorder %s34, 2
      %s36 = scalar_select %p35, 0, %s34
      %s37 = sadd.s32 %s24, %s25
      %s38 = sadd.s32 %s36, %s32
      %s39 = ssub.s32 %s37, %s38
      %p40 = scmp.eq.s32.totalorder %s39, 0
      %s42 = sadd.s32 %s41, 1
      %s43 = scalar_select %p40, %s41, %s42
      %p46 = pneg %p40
      %p47 = scmp.eq.s32.totalorder %s17, 1
      %p48 = por %p46, %p47
      %p49 = scmp.ne.s32.totalorder %s41, %s44
      %p50 = scmp.eq.s32.totalorder %s17, 0
      %p51 = por %p49, %p50
      %p52 = scmp.ne.s32.totalorder %s41, %s44
      %p53 = scmp.eq.s32.totalorder %s22, 1
      %p54 = por %p52, %p53
      %p55 = scmp.ne.s32.totalorder %s44, %s45
      %p56 = scmp.eq.s32.totalorder %s22, 0
      %p57 = por %p55, %p56
      %p58 = scmp.ne.s32.totalorder %s44, %s45
      %p59 = scmp.eq.s32.totalorder %s23, 1
      %p60 = por %p58, %p59
      %p62 = scmp.ne.s32.totalorder %s45, %s61
      %p63 = scmp.eq.s32.totalorder %s23, 0
      %p64 = por %p62, %p63
      %s65 = sadd.s32 %s24, %s25
      %s66 = sadd.s32 %s36, %s32
      %s67 = ssub.s32 %s65, %s66
      %p68 = scmp.eq.s32.totalorder %s67, 0
      %s70 = sadd.s32 %s69, 1
      %s71 = scalar_select %p68, %s69, %s70
      %p74 = pneg %p68
      %p75 = scmp.eq.s32.totalorder %s17, 1
      %p76 = por %p74, %p75
      %p77 = scmp.ne.s32.totalorder %s69, %s72
      %p78 = scmp.eq.s32.totalorder %s17, 0
      %p79 = por %p77, %p78
      %p80 = scmp.ne.s32.totalorder %s69, %s72
      %p81 = scmp.eq.s32.totalorder %s22, 1
      %p82 = por %p80, %p81
      %p83 = scmp.ne.s32.totalorder %s72, %s73
      %p84 = scmp.eq.s32.totalorder %s22, 0
      %p85 = por %p83, %p84
      %p86 = scmp.ne.s32.totalorder %s72, %s73
      %p87 = scmp.eq.s32.totalorder %s23, 1
      %p88 = por %p86, %p87
      %p90 = scmp.ne.s32.totalorder %s73, %s89
      %p91 = scmp.eq.s32.totalorder %s23, 0
      %p92 = por %p90, %p91
      %s93 = ssub.s32 %s24, %s36
      %p94 = scmp.eq.s32.totalorder %s93, 0
      %s96 = sadd.s32 %s95, 1
      %s97 = scalar_select %p94, %s95, %s96
      %p100 = pneg %p94
      %p101 = scmp.eq.s32.totalorder %s17, 1
      %p102 = por %p100, %p101
      %p103 = scmp.ne.s32.totalorder %s95, %s98
      %p104 = scmp.eq.s32.totalorder %s17, 0
      %p105 = por %p103, %p104
      %p106 = scmp.ne.s32.totalorder %s95, %s98
      %p107 = scmp.eq.s32.totalorder %s22, 1
      %p108 = por %p106, %p107
      %p109 = scmp.ne.s32.totalorder %s98, %s99
      %p110 = scmp.eq.s32.totalorder %s22, 0
      %p111 = por %p109, %p110
      %p112 = scmp.ne.s32.totalorder %s98, %s99
      %p113 = scmp.eq.s32.totalorder %s23, 1
      %p114 = por %p112, %p113
      %p116 = scmp.ne.s32.totalorder %s99, %s115
      %p117 = scmp.eq.s32.totalorder %s23, 0
      %p118 = por %p116, %p117
      %p119 = scmp.le.s32.totalorder 1, %s17
      %p120 = scmp.lt.s32.totalorder %s17, 3
      %p121 = pnand %p119, %p120
      %p122 = pneg %p121
      // Predicated region
      $region9: #{tpu_custom_call.1} parent=5 // pred_check
        _
      $region10: #{tpu_custom_call.1} parent=5 // pred_check_branch
        %124 = sbr.rel (%p121) target = $region12
      $region11: #{tpu_custom_call.1} parent=5 // pred_region
        %s125 = ssub.s32 %s17, 1
      $region12: #{tpu_custom_call.1} parent=5 // pred_fallthru
        _
      %p126 = scmp.lt.s32.totalorder %s17, 2
      // Predicated region
      $region13: #{tpu_custom_call.1} parent=5 // pred_check
        %p127 = pneg %p126
      $region14: #{tpu_custom_call.1} parent=5 // pred_check_branch
        %129 = sbr.rel (%p127) target = $region16
      $region15: #{tpu_custom_call.1} parent=5 // pred_region
        // Predicated region
        $region17: #{tpu_custom_call.1} parent=15 // pred_check
          %p130 = pneg %p51
        $region18: #{tpu_custom_call.1} parent=15 // pred_check_branch
          %132 = sbr.rel (%p130) target = $region20
        $region19: #{tpu_custom_call.1} parent=15 // pred_region
          %s133 = sand.u32 %s41, 1
          %s134 = scalar_lea.sflag [#allocation3], %s133
          %s135 = sand.u32 %s41, 1
          %s136 = smul.addr %s135, 16
          %s137 = scalar_lea.vmem [#allocation2], %s136
          %s138 = sadd.s32 %s24, %s25
          %s139 = smul.u32 2, %s138
          %s141 = ssub.s32 256, 256
          %142 = vsyncadd %s134, %s141
          %s143 = smul.addr %s139, 128
          %s144 = scalar_lea.hbm %s0, %s143
          %s145 = sshll.u32 %s137, 4
          %s146 = int_to_ptr.vmem [resolvable:$true] %s145
          %151 = dma.hbm_to_vmem [thread:$0]  %s144, 256, %s146, %s134, 128, 128, 8
        $region20: #{tpu_custom_call.1} parent=15 // pred_fallthru
          _
        // Predicated region
        $region21: #{tpu_custom_call.1} parent=15 // pred_check
          %p152 = pneg %p79
        $region22: #{tpu_custom_call.1} parent=15 // pred_check_branch
          %154 = sbr.rel (%p152) target = $region24
        $region23: #{tpu_custom_call.1} parent=15 // pred_region
          %s155 = sand.u32 %s69, 1
          %s156 = scalar_lea.sflag [#allocation6], %s155
          %s157 = sand.u32 %s69, 1
          %s158 = smul.addr %s157, 16
          %s159 = scalar_lea.vmem [#allocation5], %s158
          %s160 = sadd.s32 %s24, %s25
          %s161 = smul.u32 2, %s160
          %s163 = ssub.s32 256, 256
          %164 = vsyncadd %s156, %s163
          %s165 = smul.addr %s161, 128
          %s166 = scalar_lea.hbm %s1, %s165
          %s167 = sshll.u32 %s159, 4
          %s168 = int_to_ptr.vmem [resolvable:$true] %s167
          %173 = dma.hbm_to_vmem [thread:$0]  %s166, 256, %s168, %s156, 128, 128, 8
        $region24: #{tpu_custom_call.1} parent=15 // pred_fallthru
          _
      $region16: #{tpu_custom_call.1} parent=5 // pred_fallthru
        _
      %p174 = scmp.le.s32.totalorder 1, %s17
      %p175 = scmp.lt.s32.totalorder %s17, 3
      %p176 = pnand %p174, %p175
      %p177 = pneg %p176
      // Predicated region
      $region25: #{tpu_custom_call.1} parent=5 // pred_check
        _
      $region26: #{tpu_custom_call.1} parent=5 // pred_check_branch
        %179 = sbr.rel (%p176) target = $region28
      $region27: #{tpu_custom_call.1} parent=5 // pred_region
        %s180 = ssub.s32 %s17, 1
        %s181 = sand.u32 %s44, 1
        %s182 = scalar_lea.sflag [#allocation3], %s181
        %s183 = sand.u32 %s44, 1
        %s184 = smul.addr %s183, 16
        %s185 = scalar_lea.vmem [#allocation2], %s184
        // Predicated region
        $region29: #{tpu_custom_call.1} parent=27 // pred_check
          %p186 = pneg %p57
        $region30: #{tpu_custom_call.1} parent=27 // pred_check_branch
          %188 = sbr.rel (%p186) target = $region32
        $region31: #{tpu_custom_call.1} parent=27 // pred_region
          %189 = dma.done %s182, 256
        $region32: #{tpu_custom_call.1} parent=27 // pred_fallthru
          _
        %s190 = sand.u32 %s72, 1
        %s191 = scalar_lea.sflag [#allocation6], %s190
        %s192 = sand.u32 %s72, 1
        %s193 = smul.addr %s192, 16
        %s194 = scalar_lea.vmem [#allocation5], %s193
        // Predicated region
        $region33: #{tpu_custom_call.1} parent=27 // pred_check
          %p195 = pneg %p85
        $region34: #{tpu_custom_call.1} parent=27 // pred_check_branch
          %197 = sbr.rel (%p195) target = $region36
        $region35: #{tpu_custom_call.1} parent=27 // pred_region
          %198 = dma.done %s191, 256
        $region36: #{tpu_custom_call.1} parent=27 // pred_fallthru
          _
        %s199 = sand.u32 %s44, 1
        %s200 = scalar_lea.sflag [#allocation3], %s199
        %s201 = sand.u32 %s44, 1
        %s202 = smul.addr %s201, 16
        %s203 = scalar_lea.vmem [#allocation2], %s202
        %p204 = pneg %p57
        %p205 = pneg %p54
        %s206 = sand.u32 %s72, 1
        %s207 = scalar_lea.sflag [#allocation6], %s206
        %s208 = sand.u32 %s72, 1
        %s209 = smul.addr %s208, 16
        %s210 = scalar_lea.vmem [#allocation5], %s209
        %p211 = pneg %p85
        %p212 = pneg %p82
        %p213 = pneg %p111
        %p214 = pneg %p108
        %s215 = sand.u32 %s98, 1
        %s216 = scalar_lea.sflag [#allocation4], %s215
        %s217 = sand.u32 %s98, 1
        %s218 = smul.addr %s217, 8
        %s219 = scalar_lea.vmem [#allocation7], %s218
        %s220 = sadd.s32 %s26, %s27
        %s221 = smul.u32 2, %s220
        %s222 = sadd.s32 %s26, %s27
        %s223 = smul.u32 2, %s222
        %p224 = scmp.eq.s32.totalorder %s27, 0
        // Predicated region
        $region37: #{tpu_custom_call.1} parent=27 // pred_check
          %p225 = pneg %p224
        $region38: #{tpu_custom_call.1} parent=27 // pred_check_branch
          %227 = sbr.rel (%p225) target = $region40
        $region39: #{tpu_custom_call.1} parent=27 // pred_region
          %228 = vst [vmem:[%s219] sm:$0xff] 0.0
        $region40: #{tpu_custom_call.1} parent=27 // pred_fallthru
          _
        %v229 = vld [vmem:[%s185] sm:$0xff]
        %v230 = vld [vmem:[%s185 + $0x8] sm:$0xff]
        %v231 = vld [vmem:[%s194] sm:$0xff]
        %v232 = vld [vmem:[%s194 + $0x8] sm:$0xff]
        %v233 = vsub.f32 %v229, %v231
        %v234 = vsub.f32 %v230, %v232
        %v235 = vmul.f32 %v233, %v233
        %v236 = vmul.f32 %v234, %v234
        %v237 = vld [vmem:[%s219] sm:$0xff]
        %v238 = vadd.f32 %v235, %v236
        %v239 = vadd.f32 %v237, %v238
        %240 = vst [vmem:[%s219] sm:$0xff] %v239
        %s241 = sand.u32 %s98, 1
        %s242 = scalar_lea.sflag [#allocation4], %s241
        %s243 = sand.u32 %s98, 1
        %s244 = smul.addr %s243, 8
        %s245 = scalar_lea.vmem [#allocation7], %s244
        // Predicated region
        $region41: #{tpu_custom_call.1} parent=27 // pred_check
          %p246 = pneg %p108
        $region42: #{tpu_custom_call.1} parent=27 // pred_check_branch
          %248 = sbr.rel (%p246) target = $region44
        $region43: #{tpu_custom_call.1} parent=27 // pred_region
          %s250 = ssub.s32 128, 128
          %251 = vsyncadd %s242, %s250
          %s252 = smul.addr %s26, 128
          %s253 = scalar_lea.hbm %s2, %s252
          %s255 = sshll.u32 %s245, 4
          %s256 = int_to_ptr.vmem [resolvable:$true] %s255
          %258 = dma.vmem_to_hbm [thread:$0]  %s256, 128, %s253, %s242
        $region44: #{tpu_custom_call.1} parent=27 // pred_fallthru
          _
      $region28: #{tpu_custom_call.1} parent=5 // pred_fallthru
        _
      %p259 = scmp.le.s32.totalorder 2, %s17
      // Predicated region
      $region45: #{tpu_custom_call.1} parent=5 // pred_check
        %p260 = pneg %p259
      $region46: #{tpu_custom_call.1} parent=5 // pred_check_branch
        %262 = sbr.rel (%p260) target = $region48
      $region47: #{tpu_custom_call.1} parent=5 // pred_region
        %s263 = ssub.s32 %s17, 2
        // Predicated region
        $region49: #{tpu_custom_call.1} parent=47 // pred_check
          %p264 = pneg %p114
        $region50: #{tpu_custom_call.1} parent=47 // pred_check_branch
          %266 = sbr.rel (%p264) target = $region52
        $region51: #{tpu_custom_call.1} parent=47 // pred_region
          %s267 = sand.u32 %s99, 1
          %s268 = scalar_lea.sflag [#allocation4], %s267
          %s269 = sand.u32 %s99, 1
          %s270 = smul.addr %s269, 8
          %s271 = scalar_lea.vmem [#allocation7], %s270
          %272 = dma.done %s268, 128
        $region52: #{tpu_custom_call.1} parent=47 // pred_fallthru
          _
      $region48: #{tpu_custom_call.1} parent=5 // pred_fallthru
        _
    $region6: #{tpu_custom_call.1} parent=1 // loop_footer
      %s21 = sadd.s32 1, %s17
    $region7: #{tpu_custom_call.1} parent=1 // loop_footer_branch
      %16 = sbr.rel target = $region3
    $region8: #{tpu_custom_call.1} parent=1 // loop_exit
      _
    %273 = vsyncpa [#allocation3], 1
    %s274 = scalar_lea.sflag [#allocation3], 1
    %275 = vsyncpa %s274, 1
    %276 = vsyncpa [#allocation6], 1
    %s277 = scalar_lea.sflag [#allocation6], 1
    %278 = vsyncpa %s277, 1
    %279 = vsyncpa [#allocation4], 1
    %s280 = scalar_lea.sflag [#allocation4], 1
    %281 = vsyncpa %s280, 1

</llo_original>
